<compile_context>
chip_gen: v7x
topology: tpu7x:2x2x1
jax: 0.10.0
libtpu: 0.0.40
codegen_flags: <defaults>
</compile_context>

<pallas_src>
import functools

import jax
import jax.numpy as jnp
from jax.experimental import pallas as pl
from jax.experimental.pallas import tpu as pltpu

EPS = 1e-5
LEAKY_SLOPE = 0.01  # nn.LeakyReLU() default negative_slope


# ----------------------------- fused Pallas kernel ---------------------------

def _fused_kernel(x_ref, w1_ref, w2_ref, w3_ref, pw_ref, bn_ref, sp_ref,
                  o_ref, x1_ref, *,
                  B, G1, L1, G2, L2, L3, K3, S2, H, E):
    f32 = jnp.float32
    bf16 = jnp.bfloat16

    # ---------------- conv1 + BatchNorm1d (batch stats) + ReLU ----------------
    # x_ref is the stride-folded (space-to-depth) input: (B*G1, S1*Cin) bf16.
    # Both conv taps are packed along the output dim of w1 -> ONE MXU dot.
    t = jnp.dot(x_ref[...], w1_ref[...], preferred_element_type=f32)   # (B*G1, 2H)
    t0, t1 = t[:, :H], t[:, H:]
    # Per-batch shift/add glue: cheap VPU slices, MXU work stays batch-merged.
    y1 = jnp.concatenate(
        [t0[b * G1:b * G1 + L1, :] + t1[b * G1 + 1:b * G1 + 1 + L1, :]
         for b in range(B)], axis=0)                                    # (B*L1, H)
    # Conv bias omitted: exactly cancelled by the BN mean subtraction.
    m1 = jnp.mean(y1, axis=0, keepdims=True)
    v1 = jnp.mean((y1 - m1) ** 2, axis=0, keepdims=True)                # biased var
    sc1 = bn_ref[0:1, :] * jax.lax.rsqrt(v1 + EPS)                      # fold gamma
    x1_ref[...] = jnp.maximum((y1 - m1) * sc1 + bn_ref[1:2, :], 0.0)    # ReLU

    # ---------------- conv2 + BatchNorm1d (batch stats) + ReLU ----------------
    # In-kernel space-to-depth regroup: S2 strided sublane reads from the
    # scratch + one lane concat (uses L1 == G2*S2 so a single strided read
    # covers every batch).  K = S2*H fills the MXU depth in a single dot.
    x2 = jnp.concatenate(
        [x1_ref[pl.ds(s, B * G2, stride=S2), :] for s in range(S2)],
        axis=-1).astype(bf16)                                           # (B*G2, S2*H)
    u = jnp.dot(x2, w2_ref[...], preferred_element_type=f32)            # (B*G2, 2H)
    u0, u1 = u[:, :H], u[:, H:]
    z2 = jnp.concatenate(
        [u0[b * G2:b * G2 + L2, :] + u1[b * G2 + 1:b * G2 + 1 + L2, :]
         for b in range(B)], axis=0)                                    # (B*L2, H)
    m2 = jnp.mean(z2, axis=0, keepdims=True)
    v2 = jnp.mean((z2 - m2) ** 2, axis=0, keepdims=True)
    sc2 = bn_ref[2:3, :] * jax.lax.rsqrt(v2 + EPS)
    z2 = jnp.maximum((z2 - m2) * sc2 + bn_ref[3:4, :], 0.0)

    # --------- conv3 (stride 1, bias) + adaptive max pool over time ----------
    # All K3 taps packed along the output dim of w3 -> ONE MXU dot.
    v = jnp.dot(z2.astype(bf16), w3_ref[...], preferred_element_type=f32)  # (B*L2, K3*E)
    emb = jnp.concatenate(
        [jnp.max(sum(v[b * L2 + k:b * L2 + k + L3, k * E:(k + 1) * E]
                     for k in range(K3)),
                 axis=0, keepdims=True)
         for b in range(B)], axis=0)                                    # (B, E)
    emb = emb + sp_ref[0:1, :]       # conv3 bias constant over time -> after max

    # ------ ProjectionHead: linear -> LeakyReLU -> linear -> +res -> LN ------
    proj = jnp.dot(emb.astype(bf16), pw_ref[0],
                   preferred_element_type=f32) + sp_ref[1:2, :]
    h = jnp.where(proj >= 0, proj, LEAKY_SLOPE * proj)
    y = jnp.dot(h.astype(bf16), pw_ref[1],
                preferred_element_type=f32) + sp_ref[2:3, :] + proj
    mu = jnp.mean(y, axis=-1, keepdims=True)
    var = jnp.mean((y - mu) ** 2, axis=-1, keepdims=True)
    o_ref[...] = ((y - mu) * jax.lax.rsqrt(var + EPS)
                  * sp_ref[3:4, :] + sp_ref[4:5, :])                    # single store


# ------------------------- one-time parameter packing ------------------------

def prepare_params(p, *, strides=(5, 4)):
    """Hoisted out of the per-call path: pack/transpose/cast weights once."""
    S1, S2 = strides

    def space_to_depth_w(w, S):
        # Conv1d weight (Cout, Cin, K=2*S) -> (S*Cin, 2*Cout); column
        # j*Cout + o is tap j of out-channel o, contraction ordered (s, cin)
        # to match the grouped input rows.
        Cout, Cin, K = w.shape
        assert K == 2 * S, (K, S)
        wt = jnp.transpose(w, (2, 1, 0)).reshape(2, S * Cin, Cout)
        return jnp.concatenate([wt[0], wt[1]], axis=-1)

    E, _, K3 = p["w3"].shape
    w3t = jnp.transpose(p["w3"], (2, 1, 0))                       # (K3, H, E)
    w3c = jnp.concatenate([w3t[k] for k in range(K3)], axis=-1)   # (H, K3*E)
    return {
        "w1c": space_to_depth_w(p["w1"], S1).astype(jnp.bfloat16),
        "w2c": space_to_depth_w(p["w2"], S2).astype(jnp.bfloat16),
        "w3c": w3c.astype(jnp.bfloat16),
        "pw": jnp.stack([p["pw1"], p["pw2"]]).astype(jnp.bfloat16),   # (2, E, E)
        # packed per-channel rows: [g1, bt1, g2, bt2] and [b3, pb1, pb2, ln_g, ln_b]
        "bn": jnp.stack([p["g1"], p["bt1"], p["g2"], p["bt2"]]).astype(jnp.float32),
        "sp": jnp.stack([p["b3"], p["pb1"], p["pb2"],
                         p["ln_g"], p["ln_b"]]).astype(jnp.float32),
        # conv biases b1/b2 intentionally dropped (cancelled by BatchNorm).
    }


# --------------------------------- wrapper -----------------------------------

def word_classification_audio_cnn_pool(prep, audio, *, strides=(5, 4)):
    """audio: (B, input_channels, L)  ->  (B, embedding_dim)."""
    B, Cin, L = audio.shape
    S1, S2 = strides
    H = prep["w1c"].shape[1] // 2
    E = prep["pw"].shape[-1]
    K1, K2 = 2 * S1, 2 * S2
    K3 = prep["w3c"].shape[1] // E
    L1 = (L - K1) // S1 + 1
    L2 = (L1 - K2) // S2 + 1
    L3 = L2 - K3 + 1
    G1, G2 = L1 + 1, L2 + 1
    # Batched strided regroup for conv2 requires conv1's output length to be an
    # exact multiple of S2 (true for the module's default hyper-parameters).
    assert L1 == G2 * S2, (L1, G2, S2)
    assert G1 * S1 <= L

    # NCL -> NWC, then fold the conv1 stride into channels (space-to-depth):
    # one contiguous (B*G1, S1*Cin) bf16 operand, no strided loads for conv1.
    x = jnp.transpose(audio, (0, 2, 1))[:, :G1 * S1, :]
    x = x.reshape(B * G1, S1 * Cin).astype(jnp.bfloat16)

    kernel = functools.partial(
        _fused_kernel, B=B, G1=G1, L1=L1, G2=G2, L2=L2, L3=L3,
        K3=K3, S2=S2, H=H, E=E)

    vmem = pl.BlockSpec(memory_space=pltpu.MemorySpace.VMEM)
    # Whole forward = one fused VMEM-resident invocation: at B=2 the model is
    # latency-bound and 5 batch-merged bf16 MXU dots cover all the math.
    # TODO(synk): at large B/L, add a "parallel" batch/time grid axis (with a
    # cross-tile BatchNorm stats reduction) to use both v7x TensorCores and
    # stay within its 64 MiB VMEM; not worth it at B=2.
    return pl.pallas_call(
        kernel,
        out_shape=jax.ShapeDtypeStruct((B, E), jnp.float32),
        in_specs=[vmem] * 7,
        out_specs=vmem,
        scratch_shapes=[pltpu.VMEM((B * L1, H), jnp.float32)],
    )(x, prep["w1c"], prep["w2c"], prep["w3c"], prep["pw"],
      prep["bn"], prep["sp"])


# --------------------------- pure-JAX reference -------------------------------

def _reference(params, audio):
    def conv1d(x, w, b, stride):
        y = jax.lax.conv_general_dilated(
            x, w, (stride,), "VALID", dimension_numbers=("NCH", "OIH", "NCH"))
        return y + b[None, :, None]

    def bn(x, g, bt):
        mean = jnp.mean(x, axis=(0, 2), keepdims=True)
        var = jnp.mean((x - mean) ** 2, axis=(0, 2), keepdims=True)
        return (x - mean) / jnp.sqrt(var + EPS) * g[None, :, None] + bt[None, :, None]

    x = jax.nn.relu(bn(conv1d(audio, params["w1"], params["b1"], 5),
                       params["g1"], params["bt1"]))
    x = jax.nn.relu(bn(conv1d(x, params["w2"], params["b2"], 4),
                       params["g2"], params["bt2"]))
    x = conv1d(x, params["w3"], params["b3"], 1)
    emb = jnp.max(x, axis=-1)
    proj = emb @ params["pw1"] + params["pb1"]
    h = jnp.where(proj >= 0, proj, LEAKY_SLOPE * proj)
    y = h @ params["pw2"] + params["pb2"] + proj
    mean = jnp.mean(y, axis=-1, keepdims=True)
    var = jnp.mean((y - mean) ** 2, axis=-1, keepdims=True)
    return (y - mean) / jnp.sqrt(var + EPS) * params["ln_g"] + params["ln_b"]


# ----------------------------------- main -------------------------------------

def _init_params(key, embedding_dim, hidden_dim, input_channels):
    ks = jax.random.split(key, 8)

    def conv_w(k, cout, cin, ksz):
        scale = 1.0 / jnp.sqrt(cin * ksz)
        return jax.random.uniform(k, (cout, cin, ksz), jnp.float32, -scale, scale)

    def lin_w(k, din, dout):
        scale = 1.0 / jnp.sqrt(din)
        return jax.random.uniform(k, (din, dout), jnp.float32, -scale, scale)

    return {
        "w1": conv_w(ks[0], hidden_dim, input_channels, 10),
        "b1": jax.random.normal(ks[1], (hidden_dim,), jnp.float32) * 0.02,
        "g1": jnp.ones((hidden_dim,), jnp.float32),
        "bt1": jnp.zeros((hidden_dim,), jnp.float32),
        "w2": conv_w(ks[2], hidden_dim, hidden_dim, 8),
        "b2": jax.random.normal(ks[3], (hidden_dim,), jnp.float32) * 0.02,
        "g2": jnp.ones((hidden_dim,), jnp.float32),
        "bt2": jnp.zeros((hidden_dim,), jnp.float32),
        "w3": conv_w(ks[4], embedding_dim, hidden_dim, 4),
        "b3": jax.random.normal(ks[5], (embedding_dim,), jnp.float32) * 0.02,
        "pw1": lin_w(ks[6], embedding_dim, embedding_dim),
        "pb1": jnp.zeros((embedding_dim,), jnp.float32),
        "pw2": lin_w(ks[7], embedding_dim, embedding_dim),
        "pb2": jnp.zeros((embedding_dim,), jnp.float32),
        "ln_g": jnp.ones((embedding_dim,), jnp.float32),
        "ln_b": jnp.zeros((embedding_dim,), jnp.float32),
    }


if __name__ == "__main__":
    # Small shapes consistent with the module: B=2, C_in=20, L=128,
    # hidden_dim=64, embedding_dim=32.
    B, C_IN, L = 2, 20, 128
    HIDDEN, EMB = 64, 32

    key = jax.random.PRNGKey(0)
    k_audio, k_params = jax.random.split(key)
    audio = jax.random.normal(k_audio, (B, C_IN, L), jnp.float32)
    params = _init_params(k_params, EMB, HIDDEN, C_IN)

    # One-time parameter packing (hoisted out of the per-call jit path).
    prep = jax.tree_util.tree_map(jax.block_until_ready, prepare_params(params))

    fwd = jax.jit(word_classification_audio_cnn_pool)
    out = jax.block_until_ready(fwd(prep, audio))

    ref = jax.block_until_ready(_reference(params, audio))
    assert out.shape == (B, EMB), out.shape
    # bf16 MXU operands with f32 accumulation / f32 BN+LN statistics.
    assert jnp.allclose(out, ref, atol=3e-2, rtol=3e-2), (
        float(jnp.max(jnp.abs(out - ref))))

    print("KERNEL_OK")
</pallas_src>

<mosaic_0001>
module attributes {stable_mosaic.version = 11 : i64} {
  func.func @_fused_kernel(%arg0: memref<50x100xbf16, #tpu.memory_space<vmem>>, %arg1: memref<100x128xbf16, #tpu.memory_space<vmem>>, %arg2: memref<256x128xbf16, #tpu.memory_space<vmem>>, %arg3: memref<64x128xbf16, #tpu.memory_space<vmem>>, %arg4: memref<2x32x32xbf16, #tpu.memory_space<vmem>>, %arg5: memref<4x64xf32, #tpu.memory_space<vmem>>, %arg6: memref<5x32xf32, #tpu.memory_space<vmem>>, %arg7: memref<2x32xf32, #tpu.memory_space<vmem>>, %arg8: memref<48x64xf32, #tpu.memory_space<vmem>>) attributes {dimension_semantics = [], scalar_prefetch = 0 : i64, scratch_operands = 1 : i64, tpu.core_type = #tpu.core_type<tc>} {
    %c0 = arith.constant 0 : index
    %c0_0 = arith.constant 0 : index
    %0 = vector.load %arg0[%c0, %c0_0] : memref<50x100xbf16, #tpu.memory_space<vmem>>, vector<50x100xbf16>
    %c0_1 = arith.constant 0 : index
    %c0_2 = arith.constant 0 : index
    %1 = vector.load %arg1[%c0_1, %c0_2] : memref<100x128xbf16, #tpu.memory_space<vmem>>, vector<100x128xbf16>
    %cst = arith.constant dense<0.000000e+00> : vector<50x128xf32>
    %2 = tpu.matmul %0, %1, %cst {dimension_numbers = #tpu.dot_dimension_numbers<[1], [0], [0], [1], [0, 0, 1, 1], [], []>} : vector<50x100xbf16>, vector<100x128xbf16>, vector<50x128xf32> -> vector<50x128xf32>
    %3 = vector.extract_strided_slice %2 {offsets = [0, 0], sizes = [50, 64], strides = [1, 1]} : vector<50x128xf32> to vector<50x64xf32>
    %4 = vector.extract_strided_slice %2 {offsets = [0, 64], sizes = [50, 64], strides = [1, 1]} : vector<50x128xf32> to vector<50x64xf32>
    %5 = vector.extract_strided_slice %3 {offsets = [0, 0], sizes = [24, 64], strides = [1, 1]} : vector<50x64xf32> to vector<24x64xf32>
    %6 = vector.extract_strided_slice %4 {offsets = [1, 0], sizes = [24, 64], strides = [1, 1]} : vector<50x64xf32> to vector<24x64xf32>
    %7 = arith.addf %5, %6 : vector<24x64xf32>
    %8 = vector.extract_strided_slice %3 {offsets = [25, 0], sizes = [24, 64], strides = [1, 1]} : vector<50x64xf32> to vector<24x64xf32>
    %9 = vector.extract_strided_slice %4 {offsets = [26, 0], sizes = [24, 64], strides = [1, 1]} : vector<50x64xf32> to vector<24x64xf32>
    %10 = arith.addf %8, %9 : vector<24x64xf32>
    %11 = tpu.concatenate %7, %10 in 0 : vector<24x64xf32>, vector<24x64xf32> -> vector<48x64xf32>
    %cst_3 = arith.constant dense<0.000000e+00> : vector<64xf32>
    %12 = vector.multi_reduction <add>, %11, %cst_3 [0] : vector<48x64xf32> to vector<64xf32>
    %13 = vector.shape_cast %12 : vector<64xf32> to vector<1x64xf32>
    %cst_4 = arith.constant 4.800000e+01 : f32
    %14 = vector.broadcast %cst_4 : f32 to vector<1x64xf32>
    %15 = arith.divf %13, %14 : vector<1x64xf32>
    %16 = vector.broadcast %15 : vector<1x64xf32> to vector<48x64xf32>
    %17 = arith.subf %11, %16 : vector<48x64xf32>
    %18 = arith.mulf %17, %17 : vector<48x64xf32>
    %cst_5 = arith.constant dense<0.000000e+00> : vector<64xf32>
    %19 = vector.multi_reduction <add>, %18, %cst_5 [0] : vector<48x64xf32> to vector<64xf32>
    %20 = vector.shape_cast %19 : vector<64xf32> to vector<1x64xf32>
    %cst_6 = arith.constant 4.800000e+01 : f32
    %21 = vector.broadcast %cst_6 : f32 to vector<1x64xf32>
    %22 = arith.divf %20, %21 : vector<1x64xf32>
    %c0_7 = arith.constant 0 : index
    %c0_8 = arith.constant 0 : index
    %23 = vector.load %arg5[%c0_7, %c0_8] : memref<4x64xf32, #tpu.memory_space<vmem>>, vector<1x64xf32>
    %cst_9 = arith.constant 9.99999974E-6 : f32
    %24 = vector.broadcast %cst_9 : f32 to vector<1x64xf32>
    %25 = arith.addf %22, %24 : vector<1x64xf32>
    %26 = math.rsqrt %25 : vector<1x64xf32>
    %27 = arith.mulf %23, %26 : vector<1x64xf32>
    %28 = vector.broadcast %15 : vector<1x64xf32> to vector<48x64xf32>
    %29 = arith.subf %11, %28 : vector<48x64xf32>
    %30 = vector.broadcast %27 : vector<1x64xf32> to vector<48x64xf32>
    %31 = arith.mulf %29, %30 : vector<48x64xf32>
    %c1 = arith.constant 1 : index
    %c0_10 = arith.constant 0 : index
    %32 = vector.load %arg5[%c1, %c0_10] : memref<4x64xf32, #tpu.memory_space<vmem>>, vector<1x64xf32>
    %33 = vector.broadcast %32 : vector<1x64xf32> to vector<48x64xf32>
    %34 = arith.addf %31, %33 : vector<48x64xf32>
    %cst_11 = arith.constant 0.000000e+00 : f32
    %35 = vector.broadcast %cst_11 : f32 to vector<48x64xf32>
    %36 = arith.maximumf %34, %35 : vector<48x64xf32>
    %c0_12 = arith.constant 0 : index
    %c0_13 = arith.constant 0 : index
    %37 = vector.load %arg8[%c0_12, %c0_13] : memref<48x64xf32, #tpu.memory_space<vmem>>, vector<48x64xf32>
    tpu.vector_store %arg8[%c0_12, %c0_13], %36 {strides = array<i32>} : memref<48x64xf32, #tpu.memory_space<vmem>>, vector<48x64xf32>,
    %c0_14 = arith.constant 0 : index
    %c0_15 = arith.constant 0 : index
    %38 = tpu.strided_load %arg8[%c0_14, %c0_15] {strides = array<i32: 4, 1>} : memref<48x64xf32, #tpu.memory_space<vmem>>, vector<12x64xf32>
    %c1_16 = arith.constant 1 : index
    %c0_17 = arith.constant 0 : index
    %39 = tpu.strided_load %arg8[%c1_16, %c0_17] {strides = array<i32: 4, 1>} : memref<48x64xf32, #tpu.memory_space<vmem>>, vector<12x64xf32>
    %c2 = arith.constant 2 : index
    %c0_18 = arith.constant 0 : index
    %40 = tpu.strided_load %arg8[%c2, %c0_18] {strides = array<i32: 4, 1>} : memref<48x64xf32, #tpu.memory_space<vmem>>, vector<12x64xf32>
    %c3 = arith.constant 3 : index
    %c0_19 = arith.constant 0 : index
    %41 = tpu.strided_load %arg8[%c3, %c0_19] {strides = array<i32: 4, 1>} : memref<48x64xf32, #tpu.memory_space<vmem>>, vector<12x64xf32>
    %42 = tpu.concatenate %38, %39, %40, %41 in 1 : vector<12x64xf32>, vector<12x64xf32>, vector<12x64xf32>, vector<12x64xf32> -> vector<12x256xf32>
    %43 = arith.truncf %42 : vector<12x256xf32> to vector<12x256xbf16>
    %c0_20 = arith.constant 0 : index
    %c0_21 = arith.constant 0 : index
    %44 = vector.load %arg2[%c0_20, %c0_21] : memref<256x128xbf16, #tpu.memory_space<vmem>>, vector<256x128xbf16>
    %cst_22 = arith.constant dense<0.000000e+00> : vector<12x128xf32>
    %45 = tpu.matmul %43, %44, %cst_22 {dimension_numbers = #tpu.dot_dimension_numbers<[1], [0], [0], [1], [0, 0, 1, 1], [], []>} : vector<12x256xbf16>, vector<256x128xbf16>, vector<12x128xf32> -> vector<12x128xf32>
    %46 = vector.extract_strided_slice %45 {offsets = [0, 0], sizes = [12, 64], strides = [1, 1]} : vector<12x128xf32> to vector<12x64xf32>
    %47 = vector.extract_strided_slice %45 {offsets = [0, 64], sizes = [12, 64], strides = [1, 1]} : vector<12x128xf32> to vector<12x64xf32>
    %48 = vector.extract_strided_slice %46 {offsets = [0, 0], sizes = [5, 64], strides = [1, 1]} : vector<12x64xf32> to vector<5x64xf32>
    %49 = vector.extract_strided_slice %47 {offsets = [1, 0], sizes = [5, 64], strides = [1, 1]} : vector<12x64xf32> to vector<5x64xf32>
    %50 = arith.addf %48, %49 : vector<5x64xf32>
    %51 = vector.extract_strided_slice %46 {offsets = [6, 0], sizes = [5, 64], strides = [1, 1]} : vector<12x64xf32> to vector<5x64xf32>
    %52 = vector.extract_strided_slice %47 {offsets = [7, 0], sizes = [5, 64], strides = [1, 1]} : vector<12x64xf32> to vector<5x64xf32>
    %53 = arith.addf %51, %52 : vector<5x64xf32>
    %54 = tpu.concatenate %50, %53 in 0 : vector<5x64xf32>, vector<5x64xf32> -> vector<10x64xf32>
    %cst_23 = arith.constant dense<0.000000e+00> : vector<64xf32>
    %55 = vector.multi_reduction <add>, %54, %cst_23 [0] : vector<10x64xf32> to vector<64xf32>
    %56 = vector.shape_cast %55 : vector<64xf32> to vector<1x64xf32>
    %cst_24 = arith.constant 1.000000e+01 : f32
    %57 = vector.broadcast %cst_24 : f32 to vector<1x64xf32>
    %58 = arith.divf %56, %57 : vector<1x64xf32>
    %59 = vector.broadcast %58 : vector<1x64xf32> to vector<10x64xf32>
    %60 = arith.subf %54, %59 : vector<10x64xf32>
    %61 = arith.mulf %60, %60 : vector<10x64xf32>
    %cst_25 = arith.constant dense<0.000000e+00> : vector<64xf32>
    %62 = vector.multi_reduction <add>, %61, %cst_25 [0] : vector<10x64xf32> to vector<64xf32>
    %63 = vector.shape_cast %62 : vector<64xf32> to vector<1x64xf32>
    %cst_26 = arith.constant 1.000000e+01 : f32
    %64 = vector.broadcast %cst_26 : f32 to vector<1x64xf32>
    %65 = arith.divf %63, %64 : vector<1x64xf32>
    %c2_27 = arith.constant 2 : index
    %c0_28 = arith.constant 0 : index
    %66 = vector.load %arg5[%c2_27, %c0_28] : memref<4x64xf32, #tpu.memory_space<vmem>>, vector<1x64xf32>
    %cst_29 = arith.constant 9.99999974E-6 : f32
    %67 = vector.broadcast %cst_29 : f32 to vector<1x64xf32>
    %68 = arith.addf %65, %67 : vector<1x64xf32>
    %69 = math.rsqrt %68 : vector<1x64xf32>
    %70 = arith.mulf %66, %69 : vector<1x64xf32>
    %71 = vector.broadcast %58 : vector<1x64xf32> to vector<10x64xf32>
    %72 = arith.subf %54, %71 : vector<10x64xf32>
    %73 = vector.broadcast %70 : vector<1x64xf32> to vector<10x64xf32>
    %74 = arith.mulf %72, %73 : vector<10x64xf32>
    %c3_30 = arith.constant 3 : index
    %c0_31 = arith.constant 0 : index
    %75 = vector.load %arg5[%c3_30, %c0_31] : memref<4x64xf32, #tpu.memory_space<vmem>>, vector<1x64xf32>
    %76 = vector.broadcast %75 : vector<1x64xf32> to vector<10x64xf32>
    %77 = arith.addf %74, %76 : vector<10x64xf32>
    %cst_32 = arith.constant 0.000000e+00 : f32
    %78 = vector.broadcast %cst_32 : f32 to vector<10x64xf32>
    %79 = arith.maximumf %77, %78 : vector<10x64xf32>
    %80 = arith.truncf %79 : vector<10x64xf32> to vector<10x64xbf16>
    %c0_33 = arith.constant 0 : index
    %c0_34 = arith.constant 0 : index
    %81 = vector.load %arg3[%c0_33, %c0_34] : memref<64x128xbf16, #tpu.memory_space<vmem>>, vector<64x128xbf16>
    %cst_35 = arith.constant dense<0.000000e+00> : vector<10x128xf32>
    %82 = tpu.matmul %80, %81, %cst_35 {dimension_numbers = #tpu.dot_dimension_numbers<[1], [0], [0], [1], [0, 0, 1, 1], [], []>} : vector<10x64xbf16>, vector<64x128xbf16>, vector<10x128xf32> -> vector<10x128xf32>
    %83 = vector.extract_strided_slice %82 {offsets = [0, 0], sizes = [2, 32], strides = [1, 1]} : vector<10x128xf32> to vector<2x32xf32>
    %cst_36 = arith.constant 0.000000e+00 : f32
    %84 = vector.broadcast %cst_36 : f32 to vector<2x32xf32>
    %85 = arith.addf %84, %83 : vector<2x32xf32>
    %86 = vector.extract_strided_slice %82 {offsets = [1, 32], sizes = [2, 32], strides = [1, 1]} : vector<10x128xf32> to vector<2x32xf32>
    %87 = arith.addf %85, %86 : vector<2x32xf32>
    %88 = vector.extract_strided_slice %82 {offsets = [2, 64], sizes = [2, 32], strides = [1, 1]} : vector<10x128xf32> to vector<2x32xf32>
    %89 = arith.addf %87, %88 : vector<2x32xf32>
    %90 = vector.extract_strided_slice %82 {offsets = [3, 96], sizes = [2, 32], strides = [1, 1]} : vector<10x128xf32> to vector<2x32xf32>
    %91 = arith.addf %89, %90 : vector<2x32xf32>
    %cst_37 = arith.constant dense<0xFF800000> : vector<32xf32>
    %92 = vector.multi_reduction <maximumf>, %91, %cst_37 [0] : vector<2x32xf32> to vector<32xf32>
    %93 = vector.shape_cast %92 : vector<32xf32> to vector<1x32xf32>
    %94 = vector.extract_strided_slice %82 {offsets = [5, 0], sizes = [2, 32], strides = [1, 1]} : vector<10x128xf32> to vector<2x32xf32>
    %cst_38 = arith.constant 0.000000e+00 : f32
    %95 = vector.broadcast %cst_38 : f32 to vector<2x32xf32>
    %96 = arith.addf %95, %94 : vector<2x32xf32>
    %97 = vector.extract_strided_slice %82 {offsets = [6, 32], sizes = [2, 32], strides = [1, 1]} : vector<10x128xf32> to vector<2x32xf32>
    %98 = arith.addf %96, %97 : vector<2x32xf32>
    %99 = vector.extract_strided_slice %82 {offsets = [7, 64], sizes = [2, 32], strides = [1, 1]} : vector<10x128xf32> to vector<2x32xf32>
    %100 = arith.addf %98, %99 : vector<2x32xf32>
    %101 = vector.extract_strided_slice %82 {offsets = [8, 96], sizes = [2, 32], strides = [1, 1]} : vector<10x128xf32> to vector<2x32xf32>
    %102 = arith.addf %100, %101 : vector<2x32xf32>
    %cst_39 = arith.constant dense<0xFF800000> : vector<32xf32>
    %103 = vector.multi_reduction <maximumf>, %102, %cst_39 [0] : vector<2x32xf32> to vector<32xf32>
    %104 = vector.shape_cast %103 : vector<32xf32> to vector<1x32xf32>
    %105 = tpu.concatenate %93, %104 in 0 : vector<1x32xf32>, vector<1x32xf32> -> vector<2x32xf32>
    %c0_40 = arith.constant 0 : index
    %c0_41 = arith.constant 0 : index
    %106 = vector.load %arg6[%c0_40, %c0_41] : memref<5x32xf32, #tpu.memory_space<vmem>>, vector<1x32xf32>
    %107 = vector.broadcast %106 : vector<1x32xf32> to vector<2x32xf32>
    %108 = arith.addf %105, %107 : vector<2x32xf32>
    %109 = arith.truncf %108 : vector<2x32xf32> to vector<2x32xbf16>
    %c0_42 = arith.constant 0 : index
    %c0_43 = arith.constant 0 : index
    %c0_44 = arith.constant 0 : index
    %110 = vector.load %arg4[%c0_42, %c0_43, %c0_44] : memref<2x32x32xbf16, #tpu.memory_space<vmem>>, vector<1x32x32xbf16>
    %111 = vector.shape_cast %110 : vector<1x32x32xbf16> to vector<32x32xbf16>
    %cst_45 = arith.constant dense<0.000000e+00> : vector<2x32xf32>
    %112 = tpu.matmul %109, %111, %cst_45 {dimension_numbers = #tpu.dot_dimension_numbers<[1], [0], [0], [1], [0, 0, 1, 1], [], []>} : vector<2x32xbf16>, vector<32x32xbf16>, vector<2x32xf32> -> vector<2x32xf32>
    %c1_46 = arith.constant 1 : index
    %c0_47 = arith.constant 0 : index
    %113 = vector.load %arg6[%c1_46, %c0_47] : memref<5x32xf32, #tpu.memory_space<vmem>>, vector<1x32xf32>
    %114 = vector.broadcast %113 : vector<1x32xf32> to vector<2x32xf32>
    %115 = arith.addf %112, %114 : vector<2x32xf32>
    %cst_48 = arith.constant 0.000000e+00 : f32
    %116 = vector.broadcast %cst_48 : f32 to vector<2x32xf32>
    %117 = arith.cmpf oge, %115, %116 : vector<2x32xf32>
    %cst_49 = arith.constant 0.00999999977 : f32
    %118 = vector.broadcast %cst_49 : f32 to vector<2x32xf32>
    %119 = arith.mulf %118, %115 : vector<2x32xf32>
    %120 = arith.select %117, %115, %119 : vector<2x32xi1>, vector<2x32xf32>
    %121 = arith.truncf %120 : vector<2x32xf32> to vector<2x32xbf16>
    %c1_50 = arith.constant 1 : index
    %c0_51 = arith.constant 0 : index
    %c0_52 = arith.constant 0 : index
    %122 = vector.load %arg4[%c1_50, %c0_51, %c0_52] : memref<2x32x32xbf16, #tpu.memory_space<vmem>>, vector<1x32x32xbf16>
    %123 = vector.shape_cast %122 : vector<1x32x32xbf16> to vector<32x32xbf16>
    %cst_53 = arith.constant dense<0.000000e+00> : vector<2x32xf32>
    %124 = tpu.matmul %121, %123, %cst_53 {dimension_numbers = #tpu.dot_dimension_numbers<[1], [0], [0], [1], [0, 0, 1, 1], [], []>} : vector<2x32xbf16>, vector<32x32xbf16>, vector<2x32xf32> -> vector<2x32xf32>
    %c2_54 = arith.constant 2 : index
    %c0_55 = arith.constant 0 : index
    %125 = vector.load %arg6[%c2_54, %c0_55] : memref<5x32xf32, #tpu.memory_space<vmem>>, vector<1x32xf32>
    %126 = vector.broadcast %125 : vector<1x32xf32> to vector<2x32xf32>
    %127 = arith.addf %124, %126 : vector<2x32xf32>
    %128 = arith.addf %127, %115 : vector<2x32xf32>
    %cst_56 = arith.constant dense<0.000000e+00> : vector<2xf32>
    %129 = vector.multi_reduction <add>, %128, %cst_56 [1] : vector<2x32xf32> to vector<2xf32>
    %130 = vector.shape_cast %129 : vector<2xf32> to vector<2x1xf32>
    %cst_57 = arith.constant 3.200000e+01 : f32
    %131 = vector.broadcast %cst_57 : f32 to vector<2x1xf32>
    %132 = arith.divf %130, %131 : vector<2x1xf32>
    %133 = vector.broadcast %132 : vector<2x1xf32> to vector<2x32xf32>
    %134 = arith.subf %128, %133 : vector<2x32xf32>
    %135 = arith.mulf %134, %134 : vector<2x32xf32>
    %cst_58 = arith.constant dense<0.000000e+00> : vector<2xf32>
    %136 = vector.multi_reduction <add>, %135, %cst_58 [1] : vector<2x32xf32> to vector<2xf32>
    %137 = vector.shape_cast %136 : vector<2xf32> to vector<2x1xf32>
    %cst_59 = arith.constant 3.200000e+01 : f32
    %138 = vector.broadcast %cst_59 : f32 to vector<2x1xf32>
    %139 = arith.divf %137, %138 : vector<2x1xf32>
    %140 = vector.broadcast %132 : vector<2x1xf32> to vector<2x32xf32>
    %141 = arith.subf %128, %140 : vector<2x32xf32>
    %cst_60 = arith.constant 9.99999974E-6 : f32
    %142 = vector.broadcast %cst_60 : f32 to vector<2x1xf32>
    %143 = arith.addf %139, %142 : vector<2x1xf32>
    %144 = math.rsqrt %143 : vector<2x1xf32>
    %145 = vector.broadcast %144 : vector<2x1xf32> to vector<2x32xf32>
    %146 = arith.mulf %141, %145 : vector<2x32xf32>
    %c3_61 = arith.constant 3 : index
    %c0_62 = arith.constant 0 : index
    %147 = vector.load %arg6[%c3_61, %c0_62] : memref<5x32xf32, #tpu.memory_space<vmem>>, vector<1x32xf32>
    %148 = vector.broadcast %147 : vector<1x32xf32> to vector<2x32xf32>
    %149 = arith.mulf %146, %148 : vector<2x32xf32>
    %c4 = arith.constant 4 : index
    %c0_63 = arith.constant 0 : index
    %150 = vector.load %arg6[%c4, %c0_63] : memref<5x32xf32, #tpu.memory_space<vmem>>, vector<1x32xf32>
    %151 = vector.broadcast %150 : vector<1x32xf32> to vector<2x32xf32>
    %152 = arith.addf %149, %151 : vector<2x32xf32>
    %c0_64 = arith.constant 0 : index
    %c0_65 = arith.constant 0 : index
    %153 = vector.load %arg7[%c0_64, %c0_65] : memref<2x32xf32, #tpu.memory_space<vmem>>, vector<2x32xf32>
    tpu.vector_store %arg7[%c0_64, %c0_65], %152 {strides = array<i32>} : memref<2x32xf32, #tpu.memory_space<vmem>>, vector<2x32xf32>,
    return
  }
}

</mosaic_0001>

<llo_original>
// kernel: word_classification_audio_cnn_pool.1
$region0: #{word_classification_audio_cnn_pool.1}
  #allocation0 [shape = 'u32[]', space=smem, size = 0x4, offset = 0x4, fixed_abs, tag = 'smem constant byte address 0x4 - core index']
  #allocation1 [shape = 'u32[144,128]{1,0:T(1,128)}', space=vmem, size = 0x12000, scoped, tag = 'internal scratch']
  #allocation2 [shape = 'f32[48,64]{1,0:T(8,128)}', space=vmem, size = 0x6000, scoped, tag = 'scratch operand']
  %s0 = inlined_call_operand.vmem [shape: bf16[50,100], index: 0, kind: input, shape index: {}]
  %s1 = inlined_call_operand.vmem [shape: bf16[100,128], index: 1, kind: input, shape index: {}]
  %s2 = inlined_call_operand.vmem [shape: bf16[256,128], index: 2, kind: input, shape index: {}]
  %s3 = inlined_call_operand.vmem [shape: bf16[64,128], index: 3, kind: input, shape index: {}]
  %s4 = inlined_call_operand.vmem [shape: bf16[2,32,32], index: 4, kind: input, shape index: {}]
  %s5 = inlined_call_operand.vmem [shape: f32[4,64], index: 5, kind: input, shape index: {}]
  %s6 = inlined_call_operand.vmem [shape: f32[5,32], index: 6, kind: input, shape index: {}]
  %s7 = inlined_call_operand.hbm [shape: f32[2,32], index: 7, kind: output, shape index: {}]
  %s8 = sld [smem:[#allocation0]]
  $region38: #{word_classification_audio_cnn_pool.1} parent=0
    _
  %s10 = ssub.s32 1, %s8
  %s11 = scalar_select 0, %s10, %s8
  $region1: #{word_classification_audio_cnn_pool.1} parent=0
    #allocation3 [shape = 'u8[1024]{0}', space=vmem, size = 0x400, scoped, tag = 'output window, operand 0, single buffered']
    #allocation4 [shape = 's32[1]{0}', space=sflag, size = 0x4, scoped, tag = 'scoped memory for word_classification_audio_cnn_pool.1']
    %12 = vsyncpa [#allocation4], 0
    // Predicated region
    $region2: #{word_classification_audio_cnn_pool.1} parent=1 // pred_check
      _
    $region3: #{word_classification_audio_cnn_pool.1} parent=1 // pred_check_branch
      %14 = sbr.rel (0) target = $region5
    $region4: #{word_classification_audio_cnn_pool.1} parent=1 // pred_region
      _
    $region5: #{word_classification_audio_cnn_pool.1} parent=1 // pred_fallthru
      _
    // Predicated region
    $region6: #{word_classification_audio_cnn_pool.1} parent=1 // pred_check
      _
    $region7: #{word_classification_audio_cnn_pool.1} parent=1 // pred_check_branch
      %16 = sbr.rel (0) target = $region9
    $region8: #{word_classification_audio_cnn_pool.1} parent=1 // pred_region
      _
    $region9: #{word_classification_audio_cnn_pool.1} parent=1 // pred_fallthru
      _
    // Predicated region
    $region10: #{word_classification_audio_cnn_pool.1} parent=1 // pred_check
      _
    $region11: #{word_classification_audio_cnn_pool.1} parent=1 // pred_check_branch
      %18 = sbr.rel (0) target = $region13
    $region12: #{word_classification_audio_cnn_pool.1} parent=1 // pred_region
      _
    $region13: #{word_classification_audio_cnn_pool.1} parent=1 // pred_fallthru
      _
    // Predicated region
    $region14: #{word_classification_audio_cnn_pool.1} parent=1 // pred_check
      _
    $region15: #{word_classification_audio_cnn_pool.1} parent=1 // pred_check_branch
      %20 = sbr.rel (0) target = $region17
    $region16: #{word_classification_audio_cnn_pool.1} parent=1 // pred_region
      _
    $region17: #{word_classification_audio_cnn_pool.1} parent=1 // pred_fallthru
      _
    // Predicated region
    $region18: #{word_classification_audio_cnn_pool.1} parent=1 // pred_check
      _
    $region19: #{word_classification_audio_cnn_pool.1} parent=1 // pred_check_branch
      %22 = sbr.rel (0) target = $region21
    $region20: #{word_classification_audio_cnn_pool.1} parent=1 // pred_region
      _
    $region21: #{word_classification_audio_cnn_pool.1} parent=1 // pred_fallthru
      _
    // Predicated region
    $region22: #{word_classification_audio_cnn_pool.1} parent=1 // pred_check
      _
    $region23: #{word_classification_audio_cnn_pool.1} parent=1 // pred_check_branch
      %24 = sbr.rel (0) target = $region25
    $region24: #{word_classification_audio_cnn_pool.1} parent=1 // pred_region
      _
    $region25: #{word_classification_audio_cnn_pool.1} parent=1 // pred_fallthru
      _
    // Predicated region
    $region26: #{word_classification_audio_cnn_pool.1} parent=1 // pred_check
      _
    $region27: #{word_classification_audio_cnn_pool.1} parent=1 // pred_check_branch
      %26 = sbr.rel (0) target = $region29
    $region28: #{word_classification_audio_cnn_pool.1} parent=1 // pred_region
      _
    $region29: #{word_classification_audio_cnn_pool.1} parent=1 // pred_fallthru
      _
    %v28 = vld [vmem:[%s0] sm:$0xf]
    %v29 = vld [vmem:[%s0 + $0x4] sm:$0xf]
    %v30 = vld [vmem:[%s0 + $0x8] sm:$0xf]
    %v31 = vld [vmem:[%s0 + $0xc] sm:$0xf]
    %v32 = vld [vmem:[%s0 + $0x10] sm:$0xf]
    %v33 = vld [vmem:[%s0 + $0x14] sm:$0xf]
    %v34 = vld [vmem:[%s0 + $0x18] sm:$0x1]
    %v35 = vld [vmem:[%s1] sm:$0xf]
    %v36 = vld [vmem:[%s1 + $0x4] sm:$0xf]
    %v37 = vld [vmem:[%s1 + $0x8] sm:$0xf]
    %v38 = vld [vmem:[%s1 + $0xc] sm:$0xf]
    %v39 = vld [vmem:[%s1 + $0x10] sm:$0xf]
    %v40 = vld [vmem:[%s1 + $0x14] sm:$0xf]
    %v41 = vld [vmem:[%s1 + $0x18] sm:$0xf]
    %v42 = vld [vmem:[%s1 + $0x1c] sm:$0xf]
    %v43 = vld [vmem:[%s1 + $0x20] sm:$0xf]
    %v44 = vld [vmem:[%s1 + $0x24] sm:$0xf]
    %v45 = vld [vmem:[%s1 + $0x28] sm:$0xf]
    %v46 = vld [vmem:[%s1 + $0x2c] sm:$0xf]
    %v47 = vld [vmem:[%s1 + $0x30] sm:$0x3]
    %v55 = vunpack.c.l.b16 %v28
    %v56 = vunpack.c.l.b16 %v29
    %v57 = vunpack.c.l.b16 %v30
    %v58 = vunpack.c.l.b16 %v31
    %v59 = vunpack.c.l.b16 %v32
    %v60 = vunpack.c.l.b16 %v33
    %v61 = vunpack.c.l.b16 %v34
    %v62 = vpack.c.b16 %v56, %v55
    %v63 = vpack.c.b16 %v58, %v57
    %v64 = vpack.c.b16 %v60, %v59
    %v65 = vpack.c.b16 %v61, %v61
    %v79 = vunpack.c.l.b16 %v35
    %v80 = vunpack.c.l.b16 %v36
    %v81 = vunpack.c.l.b16 %v37
    %v82 = vunpack.c.l.b16 %v38
    %v83 = vunpack.c.l.b16 %v39
    %v84 = vunpack.c.l.b16 %v40
    %v85 = vunpack.c.l.b16 %v41
    %v86 = vunpack.c.l.b16 %v42
    %v87 = vunpack.c.l.b16 %v43
    %v88 = vunpack.c.l.b16 %v44
    %v89 = vunpack.c.l.b16 %v45
    %v90 = vunpack.c.l.b16 %v46
    %v91 = vunpack.c.l.b16 %v47
    %v92 = vpack.c.b16 %v80, %v79
    %v93 = vpack.c.b16 %v82, %v81
    %v94 = vpack.c.b16 %v84, %v83
    %v95 = vpack.c.b16 %v86, %v85
    %v96 = vpack.c.b16 %v88, %v87
    %v97 = vpack.c.b16 %v90, %v89
    %v98 = vpack.c.b16 %v91, %v91
    %vm105 = vcmask 818176
    %v107 = vsel %vm105, %v62, 0
    %v110 = vsel %vm105, %v63, 0
    %v113 = vsel %vm105, %v64, 0
    %v116 = vsel %vm105, %v65, 0
    %vm118 = vcmask 1041408
    %v120 = vsel %vm118, %v98, 0
    %122 = vmatprep.subr.bf16.mxu0 0
    %123 = vmatpush1.bf16.msra.mxu0 %v92
    %124 = vmatprep.subr.bf16.mxu0 0
    %125 = vmatpush1.bf16.msra.mxu0 %v93
    %126 = vmatprep.subr.bf16.mxu0 0
    %127 = vmatpush1.bf16.msra.mxu0 %v94
    %128 = vmatprep.subr.bf16.mxu0 0
    %129 = vmatpush1.bf16.msra.mxu0 %v95
    %130 = vmatprep.subr.bf16.mxu0 0
    %131 = vmatpush1.bf16.msra.mxu0 %v96
    %132 = vmatprep.subr.bf16.mxu0 0
    %133 = vmatpush1.bf16.msra.mxu0 %v97
    %134 = vmatprep.subr.bf16.mxu0 0
    %135 = vmatpush1.bf16.msra.mxu0 %v120
    %136 = vmatprep.subr.bf16.mxu0 0
    %137 = vmatpush1.bf16.msra.mxu0 0
    %138 = vmatprep.subr.bf16.mxu0 0
    %139 = vmatpush1.bf16.msra.mxu0 0
    %140 = vmatprep.subr.bf16.mxu0 0
    %141 = vmatpush1.bf16.msra.mxu0 0
    %142 = vmatprep.subr.bf16.mxu0 0
    %143 = vmatpush1.bf16.msra.mxu0 0
    %144 = vmatprep.subr.bf16.mxu0 0
    %145 = vmatpush1.bf16.msra.mxu0 0
    %146 = vmatprep.subr.bf16.mxu0 0
    %147 = vmatpush1.bf16.msra.mxu0 0
    %148 = vmatprep.subr.bf16.mxu0 0
    %149 = vmatpush1.bf16.msra.mxu0 0
    %150 = vmatprep.subr.bf16.mxu0 0
    %151 = vmatpush1.bf16.msra.mxu0 0
    %152 = vmatprep.subr.bf16.mxu0 0
    %153 = vmatpush1.bf16.msra.mxu0 0
    %154 = vmatprep.mubr.bf16.mxu0 0
    %155 = vmatmul.mubr.bf16.gmra.mrb[0].mxu0 %v107
    %v156 = vpop.f32.mrb[0].mxu0
    %v157 = vadd.f32 0.0, %v156
    %v158 = vpop.f32.mrb[0].mxu0
    %v159 = vpop.f32.mrb[0].mxu0
    %v160 = vadd.f32 0.0, %v159
    %v161 = vpop.f32.mrb[0].mxu0
    %162 = vmatprep.mubr.bf16.mxu0 0
    %163 = vmatmul.mubr.bf16.gmra.mrb[0].mxu0 %v110
    %v164 = vpop.f32.mrb[0].mxu0
    %v165 = vadd.f32 0.0, %v164
    %v166 = vpop.f32.mrb[0].mxu0
    %v167 = vpop.f32.mrb[0].mxu0
    %v168 = vadd.f32 0.0, %v167
    %v169 = vpop.f32.mrb[0].mxu0
    %170 = vmatprep.mubr.bf16.mxu0 0
    %171 = vmatmul.mubr.bf16.gmra.mrb[0].mxu0 %v113
    %v172 = vpop.f32.mrb[0].mxu0
    %v173 = vadd.f32 0.0, %v172
    %v174 = vpop.f32.mrb[0].mxu0
    %v175 = vpop.f32.mrb[0].mxu0
    %v176 = vadd.f32 0.0, %v175
    %v177 = vpop.f32.mrb[0].mxu0
    %178 = vmatprep.mubr.bf16.mxu0 0
    %179 = vmatmul.mubr.bf16.gmra.mrb[0].mxu0 %v116
    %v180 = vpop.f32.mrb[0].mxu0
    %v181 = vadd.f32 0.0, %v180
    %v182 = vpop.f32.mrb[0].mxu0
    %v183 = vpop.f32.mrb[0].mxu0
    %v184 = vpop.f32.mrb[0].mxu0
    %185 = vdwg.mxu0
    %vm190 = vcmask 1046528
    %v191 = vrot.slane %v157, 1
    %v192 = vrot.slane %v160, 1
    %v193 = vsel %vm190, %v191, %v192
    %v194 = vrot.slane %v165, 1
    %v195 = vsel %vm190, %v192, %v194
    %v196 = vrot.slane %v168, 1
    %v197 = vsel %vm190, %v194, %v196
    %198 = vrot.lane.b32.xlu0 %v193, 64
    %v199 = vpop.permute.xlu0 %198
    %200 = vrot.lane.b32.xlu0 %v195, 64
    %v201 = vpop.permute.xlu0 %200
    %202 = vrot.lane.b32.xlu0 %v197, 64
    %v203 = vpop.permute.xlu0 %202
    %v207 = vadd.f32 %v157, %v199
    %v208 = vadd.f32 %v160, %v201
    %v209 = vadd.f32 %v165, %v203
    %v213 = vrot.slane %v173, 1
    %v214 = vsel %vm190, %v196, %v213
    %v215 = vrot.slane %v176, 1
    %v216 = vsel %vm190, %v213, %v215
    %v217 = vrot.slane %v181, 1
    %v218 = vsel %vm190, %v215, %v217
    %219 = vrot.lane.b32.xlu0 %v214, 64
    %v220 = vpop.permute.xlu0 %219
    %221 = vrot.lane.b32.xlu0 %v216, 64
    %v222 = vpop.permute.xlu0 %221
    %223 = vrot.lane.b32.xlu0 %v218, 64
    %v224 = vpop.permute.xlu0 %223
    %225 = vrot.lane.b32.xlu0 %v217, 64
    %v226 = vpop.permute.xlu0 %225
    %v231 = vadd.f32 %v168, %v220
    %v232 = vadd.f32 %v173, %v222
    %v233 = vadd.f32 %v176, %v224
    %v234 = vadd.f32 %v181, %v226
    %v239 = vrot.slane %v231, 1
    %v240 = vrot.slane %v232, 1
    %v241 = vsel %vm190, %v239, %v240
    %v242 = vrot.slane %v233, 1
    %v243 = vsel %vm190, %v240, %v242
    %v244 = vrot.slane %v234, 1
    %v245 = vsel %vm190, %v242, %v244
    %vm249 = vcmask 523264
    %v250 = vsel %vm249, %v207, 0.0
    %v251 = vsel %vm249, %v208, 0.0
    %v252 = vadd.f32 %v250, %v251
    %v253 = vsel %vm249, %v209, 0.0
    %v254 = vadd.f32 %v252, %v253
    %v255 = vsel %vm249, %v241, 0.0
    %v256 = vadd.f32 %v254, %v255
    %v257 = vsel %vm249, %v243, 0.0
    %v258 = vadd.f32 %v256, %v257
    %v259 = vsel %vm249, %v245, 0.0
    %v260 = vadd.f32 %v258, %v259
    %v261 = vrot.slane %v260, 4
    %v262 = vadd.f32 %v260, %v261
    %v263 = vrot.slane %v262, 2
    %v264 = vadd.f32 %v262, %v263
    %v265 = vrot.slane %v264, 1
    %v266 = vadd.f32 %v264, %v265
    %v267 = vrcp.pop 48.0
    %v268 = vmul.f32 %v266, %v267
    %v269 = vsub.f32 %v207, %v268
    %v270 = vsub.f32 %v208, %v268
    %v271 = vsub.f32 %v209, %v268
    %v272 = vsub.f32 %v241, %v268
    %v273 = vsub.f32 %v243, %v268
    %v274 = vsub.f32 %v245, %v268
    %v275 = vmul.f32 %v269, %v269
    %v276 = vmul.f32 %v270, %v270
    %v277 = vmul.f32 %v271, %v271
    %v278 = vmul.f32 %v272, %v272
    %v279 = vmul.f32 %v273, %v273
    %v280 = vmul.f32 %v274, %v274
    %v281 = vsel %vm249, %v275, 0.0
    %v282 = vsel %vm249, %v276, 0.0
    %v283 = vadd.f32 %v281, %v282
    %v284 = vsel %vm249, %v277, 0.0
    %v285 = vadd.f32 %v283, %v284
    %v286 = vsel %vm249, %v278, 0.0
    %v287 = vadd.f32 %v285, %v286
    %v288 = vsel %vm249, %v279, 0.0
    %v289 = vadd.f32 %v287, %v288
    %v290 = vsel %vm249, %v280, 0.0
    %v291 = vadd.f32 %v289, %v290
    %v292 = vrot.slane %v291, 4
    %v293 = vadd.f32 %v291, %v292
    %v294 = vrot.slane %v293, 2
    %v295 = vadd.f32 %v293, %v294
    %v296 = vrot.slane %v295, 1
    %v297 = vadd.f32 %v295, %v296
    %v298 = vmul.f32 %v297, %v267
    %v299 = vld [vmem:[%s5] sm:$0x1]
    %v300 = vadd.f32 %v298, 1e-05
    %v301 = vrsqrt.pop %v300
    %v302 = vmul.f32 %v299, %v301
    %v303 = vlaneseq
    %v304 = vshrl.u32 %v303, 7
    %v305 = vsub.s32 0, %v304
    %v306 = vrot.slane %v302, %v305
    %v307 = vmul.f32 %v269, %v306
    %v308 = vmul.f32 %v270, %v306
    %v309 = vmul.f32 %v271, %v306
    %v310 = vmul.f32 %v272, %v306
    %v311 = vmul.f32 %v273, %v306
    %v312 = vmul.f32 %v274, %v306
    %v313 = vld [vmem:[%s5 + $0x1] sm:$0x1]
    %v314 = vlaneseq
    %v315 = vshrl.u32 %v314, 7
    %v316 = vsub.s32 0, %v315
    %v317 = vrot.slane %v313, %v316
    %v318 = vadd.f32 %v307, %v317
    %v319 = vadd.f32 %v308, %v317
    %v320 = vadd.f32 %v309, %v317
    %v321 = vadd.f32 %v310, %v317
    %v322 = vadd.f32 %v311, %v317
    %v323 = vadd.f32 %v312, %v317
    %v324 = vmax.f32 %v318, 0.0
    %v325 = vmax.f32 %v319, 0.0
    %v326 = vmax.f32 %v320, 0.0
    %v327 = vmax.f32 %v321, 0.0
    %v328 = vmax.f32 %v322, 0.0
    %v329 = vmax.f32 %v323, 0.0
    %330 = vst.msk [vmem:[#allocation2] sm:$0xff] %vm249, %v324
    %331 = vst.msk [vmem:[#allocation2 + $0x8] sm:$0xff] %vm249, %v325
    %332 = vst.msk [vmem:[#allocation2 + $0x10] sm:$0xff] %vm249, %v326
    %333 = vst.msk [vmem:[#allocation2 + $0x18] sm:$0xff] %vm249, %v327
    %334 = vst.msk [vmem:[#allocation2 + $0x20] sm:$0xff] %vm249, %v328
    %335 = vst.msk [vmem:[#allocation2 + $0x28] sm:$0xff] %vm249, %v329
    %v336 = vld [vmem:[#allocation2] ss:$4 sm:$0xff]
    %s337 = scalar_lea.vmem [#allocation2], 32
    %v338 = vld [vmem:[%s337] ss:$4 sm:$0xf]
    %s339 = scalar_lea.vmem [#allocation2], 1
    %v340 = vld [vmem:[%s339] ss:$4 sm:$0xff]
    %s341 = scalar_lea.vmem [#allocation2], 33
    %v342 = vld [vmem:[%s341] ss:$4 sm:$0xf]
    %s343 = scalar_lea.vmem [#allocation2], 2
    %v344 = vld [vmem:[%s343] ss:$4 sm:$0xff]
    %s345 = scalar_lea.vmem [#allocation2], 34
    %v346 = vld [vmem:[%s345] ss:$4 sm:$0xf]
    %s347 = scalar_lea.vmem [#allocation2], 3
    %v348 = vld [vmem:[%s347] ss:$4 sm:$0xff]
    %s349 = scalar_lea.vmem [#allocation2], 35
    %v350 = vld [vmem:[%s349] ss:$4 sm:$0xf]
    %353 = vrot.lane.b32.xlu0 %v340, 64
    %v354 = vpop.permute.xlu0 %353
    %355 = vrot.lane.b32.xlu0 %v342, 64
    %v356 = vpop.permute.xlu0 %355
    %361 = vrot.lane.b32.xlu0 %v348, 64
    %v362 = vpop.permute.xlu0 %361
    %363 = vrot.lane.b32.xlu0 %v350, 64
    %v364 = vpop.permute.xlu0 %363
    %v367 = vsel %vm249, %v336, %v354
    %v368 = vsel %vm249, %v338, %v356
    %v369 = vsel %vm249, %v344, %v362
    %v370 = vsel %vm249, %v346, %v364
    %v371 = vpack.c.bf16 %v368, %v367
    %v372 = vpack.c.bf16 %v370, %v369
    %v373 = vld [vmem:[%s2] sm:$0xf]
    %v374 = vld [vmem:[%s2 + $0x4] sm:$0xf]
    %v375 = vld [vmem:[%s2 + $0x8] sm:$0xf]
    %v376 = vld [vmem:[%s2 + $0xc] sm:$0xf]
    %v377 = vld [vmem:[%s2 + $0x10] sm:$0xf]
    %v378 = vld [vmem:[%s2 + $0x14] sm:$0xf]
    %v379 = vld [vmem:[%s2 + $0x18] sm:$0xf]
    %v380 = vld [vmem:[%s2 + $0x1c] sm:$0xf]
    %v381 = vld [vmem:[%s2 + $0x20] sm:$0xf]
    %v382 = vld [vmem:[%s2 + $0x24] sm:$0xf]
    %v383 = vld [vmem:[%s2 + $0x28] sm:$0xf]
    %v384 = vld [vmem:[%s2 + $0x2c] sm:$0xf]
    %v385 = vld [vmem:[%s2 + $0x30] sm:$0xf]
    %v386 = vld [vmem:[%s2 + $0x34] sm:$0xf]
    %v387 = vld [vmem:[%s2 + $0x38] sm:$0xf]
    %v388 = vld [vmem:[%s2 + $0x3c] sm:$0xf]
    %v389 = vld [vmem:[%s2 + $0x40] sm:$0xf]
    %v390 = vld [vmem:[%s2 + $0x44] sm:$0xf]
    %v391 = vld [vmem:[%s2 + $0x48] sm:$0xf]
    %v392 = vld [vmem:[%s2 + $0x4c] sm:$0xf]
    %v393 = vld [vmem:[%s2 + $0x50] sm:$0xf]
    %v394 = vld [vmem:[%s2 + $0x54] sm:$0xf]
    %v395 = vld [vmem:[%s2 + $0x58] sm:$0xf]
    %v396 = vld [vmem:[%s2 + $0x5c] sm:$0xf]
    %v397 = vld [vmem:[%s2 + $0x60] sm:$0xf]
    %v398 = vld [vmem:[%s2 + $0x64] sm:$0xf]
    %v399 = vld [vmem:[%s2 + $0x68] sm:$0xf]
    %v400 = vld [vmem:[%s2 + $0x6c] sm:$0xf]
    %v401 = vld [vmem:[%s2 + $0x70] sm:$0xf]
    %v402 = vld [vmem:[%s2 + $0x74] sm:$0xf]
    %v403 = vld [vmem:[%s2 + $0x78] sm:$0xf]
    %v404 = vld [vmem:[%s2 + $0x7c] sm:$0xf]
    %v437 = vunpack.c.l.b16 %v373
    %v438 = vunpack.c.l.b16 %v374
    %v439 = vunpack.c.l.b16 %v375
    %v440 = vunpack.c.l.b16 %v376
    %v441 = vunpack.c.l.b16 %v377
    %v442 = vunpack.c.l.b16 %v378
    %v443 = vunpack.c.l.b16 %v379
    %v444 = vunpack.c.l.b16 %v380
    %v445 = vunpack.c.l.b16 %v381
    %v446 = vunpack.c.l.b16 %v382
    %v447 = vunpack.c.l.b16 %v383
    %v448 = vunpack.c.l.b16 %v384
    %v449 = vunpack.c.l.b16 %v385
    %v450 = vunpack.c.l.b16 %v386
    %v451 = vunpack.c.l.b16 %v387
    %v452 = vunpack.c.l.b16 %v388
    %v453 = vunpack.c.l.b16 %v389
    %v454 = vunpack.c.l.b16 %v390
    %v455 = vunpack.c.l.b16 %v391
    %v456 = vunpack.c.l.b16 %v392
    %v457 = vunpack.c.l.b16 %v393
    %v458 = vunpack.c.l.b16 %v394
    %v459 = vunpack.c.l.b16 %v395
    %v460 = vunpack.c.l.b16 %v396
    %v461 = vunpack.c.l.b16 %v397
    %v462 = vunpack.c.l.b16 %v398
    %v463 = vunpack.c.l.b16 %v399
    %v464 = vunpack.c.l.b16 %v400
    %v465 = vunpack.c.l.b16 %v401
    %v466 = vunpack.c.l.b16 %v402
    %v467 = vunpack.c.l.b16 %v403
    %v468 = vunpack.c.l.b16 %v404
    %v469 = vpack.c.b16 %v438, %v437
    %v470 = vpack.c.b16 %v440, %v439
    %v471 = vpack.c.b16 %v442, %v441
    %v472 = vpack.c.b16 %v444, %v443
    %v473 = vpack.c.b16 %v446, %v445
    %v474 = vpack.c.b16 %v448, %v447
    %v475 = vpack.c.b16 %v450, %v449
    %v476 = vpack.c.b16 %v452, %v451
    %v477 = vpack.c.b16 %v454, %v453
    %v478 = vpack.c.b16 %v456, %v455
    %v479 = vpack.c.b16 %v458, %v457
    %v480 = vpack.c.b16 %v460, %v459
    %v481 = vpack.c.b16 %v462, %v461
    %v482 = vpack.c.b16 %v464, %v463
    %v483 = vpack.c.b16 %v466, %v465
    %v484 = vpack.c.b16 %v468, %v467
    %501 = vmatprep.subr.bf16.mxu0 0
    %502 = vmatpush1.bf16.msra.mxu0 %v469
    %503 = vmatprep.subr.bf16.mxu0 0
    %504 = vmatpush1.bf16.msra.mxu0 %v470
    %505 = vmatprep.subr.bf16.mxu0 0
    %506 = vmatpush1.bf16.msra.mxu0 %v471
    %507 = vmatprep.subr.bf16.mxu0 0
    %508 = vmatpush1.bf16.msra.mxu0 %v472
    %509 = vmatprep.subr.bf16.mxu0 0
    %510 = vmatpush1.bf16.msra.mxu0 %v473
    %511 = vmatprep.subr.bf16.mxu0 0
    %512 = vmatpush1.bf16.msra.mxu0 %v474
    %513 = vmatprep.subr.bf16.mxu0 0
    %514 = vmatpush1.bf16.msra.mxu0 %v475
    %515 = vmatprep.subr.bf16.mxu0 0
    %516 = vmatpush1.bf16.msra.mxu0 %v476
    %517 = vmatprep.subr.bf16.mxu0 0
    %518 = vmatpush1.bf16.msra.mxu0 %v477
    %519 = vmatprep.subr.bf16.mxu0 0
    %520 = vmatpush1.bf16.msra.mxu0 %v478
    %521 = vmatprep.subr.bf16.mxu0 0
    %522 = vmatpush1.bf16.msra.mxu0 %v479
    %523 = vmatprep.subr.bf16.mxu0 0
    %524 = vmatpush1.bf16.msra.mxu0 %v480
    %525 = vmatprep.subr.bf16.mxu0 0
    %526 = vmatpush1.bf16.msra.mxu0 %v481
    %527 = vmatprep.subr.bf16.mxu0 0
    %528 = vmatpush1.bf16.msra.mxu0 %v482
    %529 = vmatprep.subr.bf16.mxu0 0
    %530 = vmatpush1.bf16.msra.mxu0 %v483
    %531 = vmatprep.subr.bf16.mxu0 0
    %532 = vmatpush1.bf16.msra.mxu0 %v484
    %533 = vmatprep.mubr.bf16.mxu0 %v372
    %534 = vmatmul.mubr.bf16.gmra.mrb[0].mxu0 %v371
    %v535 = vpop.f32.mrb[0].mxu0
    %v536 = vadd.f32 0.0, %v535
    %v537 = vpop.f32.mrb[0].mxu0
    %v538 = vpop.f32.mrb[0].mxu0
    %v539 = vadd.f32 0.0, %v538
    %v540 = vpop.f32.mrb[0].mxu0
    %541 = vdwg.mxu0
    %v543 = vrot.slane %v536, 1
    %544 = vrot.lane.b32.xlu0 %v543, 64
    %v545 = vpop.permute.xlu0 %544
    %v547 = vadd.f32 %v536, %v545
    %v549 = vrot.slane %v539, 1
    %v550 = vsel %vm190, %v543, %v549
    %551 = vrot.lane.b32.xlu0 %v550, 64
    %v552 = vpop.permute.xlu0 %551
    %553 = vrot.lane.b32.xlu0 %v549, 64
    %v554 = vpop.permute.xlu0 %553
    %v557 = vadd.f32 %v536, %v552
    %v558 = vadd.f32 %v539, %v554
    %v561 = vrot.slane %v557, 1
    %v562 = vrot.slane %v558, 1
    %v563 = vsel %vm190, %v561, %v562
    %vm566 = vcmask 1044480
    %v567 = vsel %vm566, %v547, %v563
    %v568 = vsel %vm249, %v567, 0.0
    %vm569 = vcmask 517120
    %v570 = vsel %vm569, %v562, 0.0
    %v571 = vadd.f32 %v568, %v570
    %v572 = vrot.slane %v571, 4
    %v573 = vadd.f32 %v571, %v572
    %v574 = vrot.slane %v573, 2
    %v575 = vadd.f32 %v573, %v574
    %v576 = vrot.slane %v575, 1
    %v577 = vadd.f32 %v575, %v576
    %v578 = vrcp.pop 10.0
    %v579 = vmul.f32 %v577, %v578
    %v580 = vsub.f32 %v567, %v579
    %v581 = vsub.f32 %v562, %v579
    %v582 = vmul.f32 %v580, %v580
    %v583 = vmul.f32 %v581, %v581
    %v584 = vsel %vm249, %v582, 0.0
    %v585 = vsel %vm569, %v583, 0.0
    %v586 = vadd.f32 %v584, %v585
    %v587 = vrot.slane %v586, 4
    %v588 = vadd.f32 %v586, %v587
    %v589 = vrot.slane %v588, 2
    %v590 = vadd.f32 %v588, %v589
    %v591 = vrot.slane %v590, 1
    %v592 = vadd.f32 %v590, %v591
    %v593 = vmul.f32 %v592, %v578
    %v594 = vld [vmem:[%s5 + $0x2] sm:$0x1]
    %v595 = vadd.f32 %v593, 1e-05
    %v596 = vrsqrt.pop %v595
    %v597 = vmul.f32 %v594, %v596
    %v598 = vlaneseq
    %v599 = vshrl.u32 %v598, 7
    %v600 = vsub.s32 0, %v599
    %v601 = vrot.slane %v597, %v600
    %v602 = vmul.f32 %v580, %v601
    %v603 = vmul.f32 %v581, %v601
    %v604 = vld [vmem:[%s5 + $0x3] sm:$0x1]
    %v605 = vlaneseq
    %v606 = vshrl.u32 %v605, 7
    %v607 = vsub.s32 0, %v606
    %v608 = vrot.slane %v604, %v607
    %v609 = vadd.f32 %v602, %v608
    %v610 = vadd.f32 %v603, %v608
    %v611 = vmax.f32 %v609, 0.0
    %v612 = vmax.f32 %v610, 0.0
    %v613 = vpack.c.bf16 %v612, %v611
    %v614 = vld [vmem:[%s3] sm:$0xf]
    %v615 = vld [vmem:[%s3 + $0x4] sm:$0xf]
    %v616 = vld [vmem:[%s3 + $0x8] sm:$0xf]
    %v617 = vld [vmem:[%s3 + $0xc] sm:$0xf]
    %v618 = vld [vmem:[%s3 + $0x10] sm:$0xf]
    %v619 = vld [vmem:[%s3 + $0x14] sm:$0xf]
    %v620 = vld [vmem:[%s3 + $0x18] sm:$0xf]
    %v621 = vld [vmem:[%s3 + $0x1c] sm:$0xf]
    %v630 = vunpack.c.l.b16 %v614
    %v631 = vunpack.c.l.b16 %v615
    %v632 = vunpack.c.l.b16 %v616
    %v633 = vunpack.c.l.b16 %v617
    %v634 = vunpack.c.l.b16 %v618
    %v635 = vunpack.c.l.b16 %v619
    %v636 = vunpack.c.l.b16 %v620
    %v637 = vunpack.c.l.b16 %v621
    %v638 = vpack.c.b16 %v631, %v630
    %v639 = vpack.c.b16 %v633, %v632
    %v640 = vpack.c.b16 %v635, %v634
    %v641 = vpack.c.b16 %v637, %v636
    %v647 = vsel %vm249, %v613, 0
    %649 = vmatprep.subr.bf16.mxu0 0
    %650 = vmatpush1.bf16.msra.mxu0 %v638
    %651 = vmatprep.subr.bf16.mxu0 0
    %652 = vmatpush1.bf16.msra.mxu0 %v639
    %653 = vmatprep.subr.bf16.mxu0 0
    %654 = vmatpush1.bf16.msra.mxu0 %v640
    %655 = vmatprep.subr.bf16.mxu0 0
    %656 = vmatpush1.bf16.msra.mxu0 %v641
    %657 = vmatprep.subr.bf16.mxu0 0
    %658 = vmatpush1.bf16.msra.mxu0 0
    %659 = vmatprep.subr.bf16.mxu0 0
    %660 = vmatpush1.bf16.msra.mxu0 0
    %661 = vmatprep.subr.bf16.mxu0 0
    %662 = vmatpush1.bf16.msra.mxu0 0
    %663 = vmatprep.subr.bf16.mxu0 0
    %664 = vmatpush1.bf16.msra.mxu0 0
    %665 = vmatprep.subr.bf16.mxu0 0
    %666 = vmatpush1.bf16.msra.mxu0 0
    %667 = vmatprep.subr.bf16.mxu0 0
    %668 = vmatpush1.bf16.msra.mxu0 0
    %669 = vmatprep.subr.bf16.mxu0 0
    %670 = vmatpush1.bf16.msra.mxu0 0
    %671 = vmatprep.subr.bf16.mxu0 0
    %672 = vmatpush1.bf16.msra.mxu0 0
    %673 = vmatprep.subr.bf16.mxu0 0
    %674 = vmatpush1.bf16.msra.mxu0 0
    %675 = vmatprep.subr.bf16.mxu0 0
    %676 = vmatpush1.bf16.msra.mxu0 0
    %677 = vmatprep.subr.bf16.mxu0 0
    %678 = vmatpush1.bf16.msra.mxu0 0
    %679 = vmatprep.subr.bf16.mxu0 0
    %680 = vmatpush1.bf16.msra.mxu0 0
    %681 = vmatprep.mubr.bf16.mxu0 0
    %682 = vmatmul.mubr.bf16.gmra.mrb[0].mxu0 %v647
    %v683 = vpop.f32.mrb[0].mxu0
    %v684 = vadd.f32 0.0, %v683
    %v685 = vpop.f32.mrb[0].mxu0
    %v686 = vpop.f32.mrb[0].mxu0
    %v687 = vadd.f32 0.0, %v686
    %v688 = vpop.f32.mrb[0].mxu0
    %689 = vdwg.mxu0
    %v690 = vadd.f32 %v684, 0.0
    %v692 = vrot.slane %v684, 1
    %693 = vrot.lane.b32.xlu0 %v692, 96
    %v694 = vpop.permute.xlu0 %693
    %v696 = vadd.f32 %v690, %v694
    %v697 = vrot.slane %v684, 2
    %698 = vrot.lane.b32.xlu0 %v697, 64
    %v699 = vpop.permute.xlu0 %698
    %v701 = vadd.f32 %v696, %v699
    %v702 = vrot.slane %v684, 3
    %703 = vrot.lane.b32.xlu0 %v702, 32
    %v704 = vpop.permute.xlu0 %703
    %v706 = vadd.f32 %v701, %v704
    %vm707 = vcmask 254976
    %v708 = vsel %vm707, %v706, -inf
    %v709 = vrot.slane %v708, 4
    %v710 = vmax.f32 %v708, %v709
    %v711 = vrot.slane %v710, 2
    %v712 = vmax.f32 %v710, %v711
    %v713 = vrot.slane %v712, 1
    %v714 = vmax.f32 %v712, %v713
    %vm716 = vcmask 1045504
    %v717 = vrot.slane %v687, 2
    %v718 = vsel %vm716, %v697, %v717
    %719 = vrot.lane.b32.xlu0 %v718, 64
    %v720 = vpop.permute.xlu0 %719
    %v722 = vadd.f32 %v696, %v720
    %v723 = vrot.slane %v687, 3
    %724 = vrot.lane.b32.xlu0 %v723, 32
    %v725 = vpop.permute.xlu0 %724
    %v727 = vadd.f32 %v722, %v725
    %vm728 = vcmask 260101
    %v729 = vsel %vm728, %v727, -inf
    %v730 = vrot.slane %v729, 4
    %v731 = vmax.f32 %v729, %v730
    %v732 = vrot.slane %v731, 2
    %v733 = vmax.f32 %v731, %v732
    %v734 = vrot.slane %v733, 1
    %v735 = vmax.f32 %v733, %v734
    %vm736 = vcmask 1040384
    %v737 = vsel %vm736, %v714, %v735
    %v738 = vld [vmem:[%s6] sm:$0x1]
    %v739 = vlaneseq
    %v740 = vshrl.u32 %v739, 7
    %v741 = vsub.s32 0, %v740
    %v742 = vrot.slane %v738, %v741
    %v743 = vadd.f32 %v737, %v742
    %v744 = vpack.c.bf16 %v743, %v743
    %v745 = vld [vmem:[%s4] sm:$0xf]
    %v746 = vld [vmem:[%s4 + $0x4] sm:$0xf]
    %v747 = vld [vmem:[%s4 + $0x8] sm:$0xf]
    %v748 = vld [vmem:[%s4 + $0xc] sm:$0xf]
    %v749 = vld [vmem:[%s6 + $0x1] sm:$0x1]
    %v750 = vlaneseq
    %v751 = vshrl.u32 %v750, 7
    %v752 = vsub.s32 0, %v751
    %v753 = vrot.slane %v749, %v752
    %v758 = vunpack.c.l.b16 %v745
    %v759 = vunpack.c.l.b16 %v746
    %v760 = vunpack.c.l.b16 %v747
    %v761 = vunpack.c.l.b16 %v748
    %v762 = vpack.c.b16 %v759, %v758
    %v763 = vpack.c.b16 %v761, %v760
    %vm766 = vcmask 261120
    %v768 = vsel %vm766, %v744, 0
    %770 = vmatprep.subr.bf16.mxu0 0
    %771 = vmatpush1.bf16.msra.mxu0 %v762
    %772 = vmatprep.subr.bf16.mxu0 0
    %773 = vmatpush1.bf16.msra.mxu0 %v763
    %774 = vmatprep.subr.bf16.mxu0 0
    %775 = vmatpush1.bf16.msra.mxu0 0
    %776 = vmatprep.subr.bf16.mxu0 0
    %777 = vmatpush1.bf16.msra.mxu0 0
    %778 = vmatprep.subr.bf16.mxu0 0
    %779 = vmatpush1.bf16.msra.mxu0 0
    %780 = vmatprep.subr.bf16.mxu0 0
    %781 = vmatpush1.bf16.msra.mxu0 0
    %782 = vmatprep.subr.bf16.mxu0 0
    %783 = vmatpush1.bf16.msra.mxu0 0
    %784 = vmatprep.subr.bf16.mxu0 0
    %785 = vmatpush1.bf16.msra.mxu0 0
    %786 = vmatprep.subr.bf16.mxu0 0
    %787 = vmatpush1.bf16.msra.mxu0 0
    %788 = vmatprep.subr.bf16.mxu0 0
    %789 = vmatpush1.bf16.msra.mxu0 0
    %790 = vmatprep.subr.bf16.mxu0 0
    %791 = vmatpush1.bf16.msra.mxu0 0
    %792 = vmatprep.subr.bf16.mxu0 0
    %793 = vmatpush1.bf16.msra.mxu0 0
    %794 = vmatprep.subr.bf16.mxu0 0
    %795 = vmatpush1.bf16.msra.mxu0 0
    %796 = vmatprep.subr.bf16.mxu0 0
    %797 = vmatpush1.bf16.msra.mxu0 0
    %798 = vmatprep.subr.bf16.mxu0 0
    %799 = vmatpush1.bf16.msra.mxu0 0
    %800 = vmatprep.subr.bf16.mxu0 0
    %801 = vmatpush1.bf16.msra.mxu0 0
    %802 = vmatprep.mubr.bf16.mxu0 0
    %803 = vmatmul.mubr.bf16.gmra.mrb[0].mxu0 %v768
    %v804 = vpop.f32.mrb[0].mxu0
    %v805 = vadd.f32 %v753, %v804
    %v806 = vpop.f32.mrb[0].mxu0
    %v807 = vpop.f32.mrb[0].mxu0
    %v808 = vpop.f32.mrb[0].mxu0
    %809 = vdwg.mxu0
    %vm810 = vcmp.ge.f32.partialorder %v805, 0.0
    %v811 = vmul.f32 %v805, 0.01
    %v812 = vsel %vm810, %v805, %v811
    %v813 = vpack.c.bf16 %v812, %v812
    %s814 = scalar_lea.vmem %s4, 16
    %v815 = vld [vmem:[%s814] sm:$0xf]
    %v816 = vld [vmem:[%s814 + $0x4] sm:$0xf]
    %v817 = vld [vmem:[%s814 + $0x8] sm:$0xf]
    %v818 = vld [vmem:[%s814 + $0xc] sm:$0xf]
    %v819 = vld [vmem:[%s6 + $0x2] sm:$0x1]
    %v820 = vlaneseq
    %v821 = vshrl.u32 %v820, 7
    %v822 = vsub.s32 0, %v821
    %v823 = vrot.slane %v819, %v822
    %v828 = vunpack.c.l.b16 %v815
    %v829 = vunpack.c.l.b16 %v816
    %v830 = vunpack.c.l.b16 %v817
    %v831 = vunpack.c.l.b16 %v818
    %v832 = vpack.c.b16 %v829, %v828
    %v833 = vpack.c.b16 %v831, %v830
    %v837 = vsel %vm766, %v813, 0
    %839 = vmatprep.subr.bf16.mxu0 0
    %840 = vmatpush1.bf16.msra.mxu0 %v832
    %841 = vmatprep.subr.bf16.mxu0 0
    %842 = vmatpush1.bf16.msra.mxu0 %v833
    %843 = vmatprep.subr.bf16.mxu0 0
    %844 = vmatpush1.bf16.msra.mxu0 0
    %845 = vmatprep.subr.bf16.mxu0 0
    %846 = vmatpush1.bf16.msra.mxu0 0
    %847 = vmatprep.subr.bf16.mxu0 0
    %848 = vmatpush1.bf16.msra.mxu0 0
    %849 = vmatprep.subr.bf16.mxu0 0
    %850 = vmatpush1.bf16.msra.mxu0 0
    %851 = vmatprep.subr.bf16.mxu0 0
    %852 = vmatpush1.bf16.msra.mxu0 0
    %853 = vmatprep.subr.bf16.mxu0 0
    %854 = vmatpush1.bf16.msra.mxu0 0
    %855 = vmatprep.subr.bf16.mxu0 0
    %856 = vmatpush1.bf16.msra.mxu0 0
    %857 = vmatprep.subr.bf16.mxu0 0
    %858 = vmatpush1.bf16.msra.mxu0 0
    %859 = vmatprep.subr.bf16.mxu0 0
    %860 = vmatpush1.bf16.msra.mxu0 0
    %861 = vmatprep.subr.bf16.mxu0 0
    %862 = vmatpush1.bf16.msra.mxu0 0
    %863 = vmatprep.subr.bf16.mxu0 0
    %864 = vmatpush1.bf16.msra.mxu0 0
    %865 = vmatprep.subr.bf16.mxu0 0
    %866 = vmatpush1.bf16.msra.mxu0 0
    %867 = vmatprep.subr.bf16.mxu0 0
    %868 = vmatpush1.bf16.msra.mxu0 0
    %869 = vmatprep.subr.bf16.mxu0 0
    %870 = vmatpush1.bf16.msra.mxu0 0
    %871 = vmatprep.mubr.bf16.mxu0 0
    %872 = vmatmul.mubr.bf16.gmra.mrb[0].mxu0 %v837
    %v873 = vpop.f32.mrb[0].mxu0
    %v874 = vadd.f32 %v823, %v873
    %v875 = vpop.f32.mrb[0].mxu0
    %v876 = vpop.f32.mrb[0].mxu0
    %v877 = vpop.f32.mrb[0].mxu0
    %878 = vdwg.mxu0
    %v879 = vadd.f32 %v874, %v805
    %v880 = vsel %vm707, %v879, 0.0
    %881 = vadd.xlane.f32.xlu0 %v880
    %v882 = vpop.xlane.xlu0 %881
    %v883 = vrcp.pop 32.0
    %v884 = vmul.f32 %v882, %v883
    %v885 = vsub.f32 %v879, %v884
    %v886 = vmul.f32 %v885, %v885
    %v887 = vsel %vm707, %v886, 0.0
    %888 = vadd.xlane.f32.xlu0 %v887
    %v889 = vpop.xlane.xlu0 %888
    %v890 = vmul.f32 %v889, %v883
    %v891 = vadd.f32 %v890, 1e-05
    %v892 = vrsqrt.pop %v891
    %v893 = vmul.f32 %v885, %v892
    %v894 = vld [vmem:[%s6 + $0x3] sm:$0x1]
    %v895 = vlaneseq
    %v896 = vshrl.u32 %v895, 7
    %v897 = vsub.s32 0, %v896
    %v898 = vrot.slane %v894, %v897
    %v899 = vmul.f32 %v893, %v898
    %v900 = vld [vmem:[%s6 + $0x4] sm:$0x1]
    %v901 = vlaneseq
    %v902 = vshrl.u32 %v901, 7
    %v903 = vsub.s32 0, %v902
    %v904 = vrot.slane %v900, %v903
    %v905 = vadd.f32 %v899, %v904
    %906 = vst.msk [vmem:[#allocation3] sm:$0x3] %vm707, %v905
    // Predicated region
    $region30: #{word_classification_audio_cnn_pool.1} parent=1 // pred_check
      _
    $region31: #{word_classification_audio_cnn_pool.1} parent=1 // pred_check_branch
      %908 = sbr.rel (0) target = $region33
    $region32: #{word_classification_audio_cnn_pool.1} parent=1 // pred_region
      %s910 = ssub.s32 32, 32
      %911 = vsyncadd [#allocation4], %s910
      %s913 = sshll.u32 [#allocation3], 4
      %s914 = int_to_ptr.vmem [resolvable:$true] %s913
      %916 = dma.vmem_to_hbm [thread:$0]  %s914, 32, %s7, [#allocation4]
    $region33: #{word_classification_audio_cnn_pool.1} parent=1 // pred_fallthru
      _
    // Predicated region
    $region34: #{word_classification_audio_cnn_pool.1} parent=1 // pred_check
      _
    $region35: #{word_classification_audio_cnn_pool.1} parent=1 // pred_check_branch
      %918 = sbr.rel (0) target = $region37
    $region36: #{word_classification_audio_cnn_pool.1} parent=1 // pred_region
      %919 = dma.done [#allocation4], 32
    $region37: #{word_classification_audio_cnn_pool.1} parent=1 // pred_fallthru
      _
    %920 = vsyncpa [#allocation4], 1

</llo_original>
